<compile_context>
chip_gen: v6e
topology: v6e:2x2x1
jax: 0.10.0
libtpu: 0.0.40
codegen_flags: <defaults>
</compile_context>

<pallas_src>
import numpy as np
import jax
import jax.numpy as jnp
from jax.experimental import pallas as pl
from jax.experimental.pallas import tpu as pltpu


def _round_up(v, m):
    return ((v + m - 1) // m) * m


def _default_bm_target():
    # 256-row (batch) tiles for v6e/v7x, 128 for v5e.
    try:
        kind = jax.devices()[0].device_kind.lower()
        if "v5e" in kind or "v5 lite" in kind or "v5lite" in kind:
            return 128
    except Exception:
        pass
    return 256


def _make_mac_kernel(n_agents, cp):
    N = n_agents

    def kernel(*refs):
        # refs = (x_0 .. x_{N-1}, w, bias, coef, out, s_scratch)
        x_refs = refs[:N]
        w_ref = refs[N]          # (H, cp)   compute dtype
        bias_ref = refs[N + 1]   # (1, cp)   f32
        coef_ref = refs[N + 2]   # (4*N,)    f32, SMEM:  [m | a | b | c]
        out_ref = refs[N + 3]    # (bm, N*cp)
        s_ref = refs[N + 4]      # (bm, cp)  f32 VMEM scratch (alive-weighted sum)

        w = w_ref[...]

        # Pass 1: per-sender message msg_i = x_i @ W (f32 accumulation on the MXU).
        # Accumulate S = sum_i m_i * msg_i in the VMEM scratch and stash raw msg_i
        # in the (VMEM-resident) output block for pass 2.
        for i in range(N):
            msg_i = jnp.dot(x_refs[i][...], w, preferred_element_type=jnp.float32)
            out_ref[:, i * cp:(i + 1) * cp] = msg_i.astype(out_ref.dtype)
            if i == 0:
                s_ref[...] = coef_ref[i] * msg_i
            else:
                s_ref[...] = s_ref[...] + coef_ref[i] * msg_i

        # Pass 2: per-receiver combine (exact m_j^2 form; fractional masks OK):
        #   out_j = a_j * S - b_j * msg_j + c_j * bias
        bias_row = bias_ref[...]                    # (1, cp) f32
        for j in range(N):
            a_j = coef_ref[N + j]
            b_j = coef_ref[2 * N + j]
            c_j = coef_ref[3 * N + j]
            msg_j = out_ref[:, j * cp:(j + 1) * cp].astype(jnp.float32)
            out_j = a_j * s_ref[...] - b_j * msg_j + c_j * bias_row
            out_ref[:, j * cp:(j + 1) * cp] = out_j.astype(out_ref.dtype)

    return kernel


def mac_forward(x, w_hc, bias, n_agents, alive_mask=None, no_comm=False,
                comm_mode=None, compute_dtype=jnp.bfloat16,
                out_dtype=jnp.float32, bm_target=None):
    """x: (B*N, H) hidden states (as in the torch module's forward).
    Returns (B*N, C) communication vectors (out_dtype, default float32)."""
    BN, H = x.shape
    C = w_hc.shape[1]
    N = n_agents
    assert BN % N == 0
    B = BN // N

    if no_comm:
        # Skip the kernel entirely on the no-comm path (torch does `comm *= 0`).
        return jnp.zeros((BN, C), out_dtype)

    if bm_target is None:
        bm_target = _default_bm_target()

    # Lane-dense output: pad C up to a multiple of 128.
    cp = _round_up(max(C, 128), 128)

    # ---- tiny per-agent scalar coefficients (live in SMEM) ----
    if alive_mask is None:
        m = np.ones((N,), np.float32)
        s = 1.0 / (N - 1.0) if (comm_mode == "avg" and N > 1) else 1.0
        msum = float(m.sum())
        coef = np.concatenate(
            [m, s * m, s * m * m, s * (m * msum - m * m)]).astype(np.float32)
    else:
        m = jnp.asarray(alive_mask, jnp.float32).reshape(N)
        alive = jnp.sum(m)
        if comm_mode == "avg":
            s = jnp.where(alive > 1.0, 1.0 / jnp.maximum(alive - 1.0, 1.0), 1.0)
        else:
            s = jnp.float32(1.0)
        msum = jnp.sum(m)
        coef = jnp.concatenate(
            [m, s * m, s * m * m, s * (m * msum - m * m)]).astype(jnp.float32)
    coef = jnp.asarray(coef)

    # ---- batch-tile sizing: clamp so tiny batches are not padded to full tiles ----
    bm = min(bm_target, _round_up(B, 8))
    bm = max(8, (bm // 8) * 8)

    itemsize_in = np.dtype(compute_dtype).itemsize
    itemsize_out = np.dtype(out_dtype).itemsize

    def _vmem_bytes(bm_):
        return (2 * N * bm_ * H * itemsize_in       # N x-tiles (double-buffered)
                + 2 * H * cp * itemsize_in           # weight (constant block)
                + 2 * cp * 4                         # bias row
                + 2 * bm_ * N * cp * itemsize_out    # output tile
                + bm_ * cp * 4)                      # S accumulator scratch

    while bm > 8 and _vmem_bytes(bm) > (24 << 20):
        bm = max(8, ((bm // 2) // 8) * 8)

    B_pad = _round_up(B, bm)
    num_tiles = B_pad // bm
    vmem_limit = int(min(64 << 20, max(2 * _vmem_bytes(bm) + (4 << 20), 32 << 20)))

    # ---- weights / bias, built directly in their kernel dtypes ----
    w_p = jnp.zeros((H, cp), compute_dtype).at[:, :C].set(w_hc.astype(compute_dtype))
    b_p = jnp.zeros((1, cp), jnp.float32).at[0, :C].set(bias.astype(jnp.float32))

    # ---- per-agent hidden-state slabs (slice + cast + pad fuse in XLA) ----
    x3 = x.reshape(B, N, H)
    pad_b = B_pad - B
    xs = []
    for i in range(N):
        xi = x3[:, i, :].astype(compute_dtype)
        if pad_b:
            xi = jnp.pad(xi, ((0, pad_b), (0, 0)))
        xs.append(xi)

    kernel = _make_mac_kernel(N, cp)

    in_specs = [pl.BlockSpec((bm, H), lambda t: (t, 0)) for _ in range(N)]
    in_specs.append(pl.BlockSpec((H, cp), lambda t: (0, 0)))              # weight
    in_specs.append(pl.BlockSpec((1, cp), lambda t: (0, 0)))              # bias row
    in_specs.append(pl.BlockSpec(memory_space=pltpu.MemorySpace.SMEM))    # coefficients

    out = pl.pallas_call(
        kernel,
        out_shape=jax.ShapeDtypeStruct((B_pad, N * cp), out_dtype),
        grid_spec=pltpu.PrefetchScalarGridSpec(
            num_scalar_prefetch=0,
            grid=(num_tiles,),
            in_specs=in_specs,
            out_specs=pl.BlockSpec((bm, N * cp), lambda t: (t, 0)),
            scratch_shapes=[pltpu.VMEM((bm, cp), jnp.float32)],
        ),
        compiler_params=pltpu.CompilerParams(
            dimension_semantics=("parallel",),
            vmem_limit_bytes=vmem_limit),
    )(*xs, w_p, b_p, coef)

    # (B_pad, N*cp) -> (B*N, cp) is a free row-major reshape; only the final
    # channel slice copies (and only when C < cp).  Note padded batch rows hold
    # the bias-only contribution and must stay sliced off here.
    return out[:B].reshape(B * N, cp)[:, :C]


def init_params(key, hid_size, comm_dim):
    """Deterministic synthetic init mirroring MAC.init_weights:
    xavier_normal_(weight, gain=calculate_gain('tanh')), bias.fill_(0.01)."""
    gain = 5.0 / 3.0  # tanh gain
    std = gain * np.sqrt(2.0 / (hid_size + comm_dim))
    # torch stores weight as (out, in); sample that shape then transpose to (H, C)
    w_ch = jax.random.normal(key, (comm_dim, hid_size), jnp.float32) * std
    w_hc = w_ch.T
    bias = jnp.full((comm_dim,), 0.01, jnp.float32)
    return w_hc, bias


if __name__ == "__main__":
    # Small config consistent with the module: num_agents=4, hidden_size=32,
    # comm_dim=32, batch (episodes) = 2 -> hidden_state is (B*N, H).
    B, N, H, C = 2, 4, 32, 32

    key = jax.random.PRNGKey(0)
    k_x, k_w = jax.random.split(key)
    x = jax.random.normal(k_x, (B * N, H), jnp.float32)
    w_hc, bias = init_params(k_w, H, C)

    # Plain-JAX reference of the module's default forward semantics.
    msg = x @ w_hc + bias
    msg3 = msg.reshape(B, N, C)

    # 1) f32 compute path, all agents alive: exactness check.
    out = jax.block_until_ready(
        mac_forward(x, w_hc, bias, n_agents=N, compute_dtype=jnp.float32))
    mask_full = jnp.ones((N, N)) - jnp.eye(N)
    ref = jnp.einsum("ij,bic->bjc", mask_full, msg3).reshape(B * N, C)
    assert out.shape == (B * N, C)
    np.testing.assert_allclose(np.asarray(out), np.asarray(ref),
                               rtol=1e-5, atol=1e-5)

    # 2) default bf16-input path (f32 MXU accumulation): looser tolerance.
    out_bf16 = jax.block_until_ready(mac_forward(x, w_hc, bias, n_agents=N))
    np.testing.assert_allclose(np.asarray(out_bf16), np.asarray(ref),
                               rtol=1e-1, atol=1e-1)

    # 3) alive-mask path (agent 2 dead), f32 compute.
    alive = jnp.array([1.0, 1.0, 0.0, 1.0], jnp.float32)
    out_m = jax.block_until_ready(
        mac_forward(x, w_hc, bias, n_agents=N, alive_mask=alive,
                    compute_dtype=jnp.float32))
    mask_m = (jnp.ones((N, N)) - jnp.eye(N)) * alive[None, :] * alive[:, None]
    ref_m = jnp.einsum("ij,bic->bjc", mask_m, msg3).reshape(B * N, C)
    np.testing.assert_allclose(np.asarray(out_m), np.asarray(ref_m),
                               rtol=1e-5, atol=1e-5)

    # 4) no_comm path short-circuits to zeros (no kernel launch).
    out_nc = jax.block_until_ready(
        mac_forward(x, w_hc, bias, n_agents=N, no_comm=True))
    np.testing.assert_allclose(np.asarray(out_nc), 0.0, atol=0.0)

    # TODO(synk): mha_comm (Attention), VAE/VQ-VIB/compositional message
    # generation, and the GRU/value/gating heads are not on forward()'s default
    # path and are left unimplemented.
    print("KERNEL_OK")
</pallas_src>

<mosaic_0001>
module attributes {stable_mosaic.version = 11 : i64} {
  func.func @kernel(%arg0: i32, %arg1: memref<8x32xf32, #tpu.memory_space<vmem>>, %arg2: memref<8x32xf32, #tpu.memory_space<vmem>>, %arg3: memref<8x32xf32, #tpu.memory_space<vmem>>, %arg4: memref<8x32xf32, #tpu.memory_space<vmem>>, %arg5: memref<32x128xf32, #tpu.memory_space<vmem>>, %arg6: memref<1x128xf32, #tpu.memory_space<vmem>>, %arg7: memref<16xf32, #tpu.memory_space<smem>>, %arg8: memref<8x512xf32, #tpu.memory_space<vmem>>, %arg9: memref<8x128xf32, #tpu.memory_space<vmem>>) attributes {dimension_semantics = [#tpu.dimension_semantics<parallel>], iteration_bounds = array<i64: 1>, scalar_prefetch = 0 : i64, scratch_operands = 1 : i64, tpu.core_type = #tpu.core_type<tc>, window_params = [{transform_indices = @transform_0, window_bounds = array<i64: 8, 32>}, {transform_indices = @transform_1, window_bounds = array<i64: 8, 32>}, {transform_indices = @transform_2, window_bounds = array<i64: 8, 32>}, {transform_indices = @transform_3, window_bounds = array<i64: 8, 32>}, {pipeline_mode = #tpu.pipeline_mode<synchronous>, transform_indices = @transform_4, window_bounds = array<i64: 32, 128>}, {pipeline_mode = #tpu.pipeline_mode<synchronous>, transform_indices = @transform_5, window_bounds = array<i64: 1, 128>}, {transform_indices = @transform_6, window_bounds = array<i64: 16>}, {transform_indices = @transform_7, window_bounds = array<i64: 8, 512>}]} {
    %c0 = arith.constant 0 : index
    %c0_0 = arith.constant 0 : index
    %0 = vector.load %arg5[%c0, %c0_0] : memref<32x128xf32, #tpu.memory_space<vmem>>, vector<32x128xf32>
    %c0_1 = arith.constant 0 : index
    %c0_2 = arith.constant 0 : index
    %1 = vector.load %arg1[%c0_1, %c0_2] : memref<8x32xf32, #tpu.memory_space<vmem>>, vector<8x32xf32>
    %cst = arith.constant dense<0.000000e+00> : vector<8x128xf32>
    %2 = tpu.matmul %1, %0, %cst {dimension_numbers = #tpu.dot_dimension_numbers<[1], [0], [0], [1], [0, 0, 1, 1], [], []>} : vector<8x32xf32>, vector<32x128xf32>, vector<8x128xf32> -> vector<8x128xf32>
    %c0_3 = arith.constant 0 : index
    %c0_4 = arith.constant 0 : index
    %3 = vector.load %arg8[%c0_3, %c0_4] : memref<8x512xf32, #tpu.memory_space<vmem>>, vector<8x128xf32>
    tpu.vector_store %arg8[%c0_3, %c0_4], %2 {strides = array<i32>} : memref<8x512xf32, #tpu.memory_space<vmem>>, vector<8x128xf32>,
    %c0_5 = arith.constant 0 : index
    %4 = memref.load %arg7[%c0_5] : memref<16xf32, #tpu.memory_space<smem>>
    %5 = vector.broadcast %4 : f32 to vector<8x128xf32>
    %6 = arith.mulf %5, %2 : vector<8x128xf32>
    %c0_6 = arith.constant 0 : index
    %c0_7 = arith.constant 0 : index
    %7 = vector.load %arg9[%c0_6, %c0_7] : memref<8x128xf32, #tpu.memory_space<vmem>>, vector<8x128xf32>
    tpu.vector_store %arg9[%c0_6, %c0_7], %6 {strides = array<i32>} : memref<8x128xf32, #tpu.memory_space<vmem>>, vector<8x128xf32>,
    %c0_8 = arith.constant 0 : index
    %c0_9 = arith.constant 0 : index
    %8 = vector.load %arg2[%c0_8, %c0_9] : memref<8x32xf32, #tpu.memory_space<vmem>>, vector<8x32xf32>
    %cst_10 = arith.constant dense<0.000000e+00> : vector<8x128xf32>
    %9 = tpu.matmul %8, %0, %cst_10 {dimension_numbers = #tpu.dot_dimension_numbers<[1], [0], [0], [1], [0, 0, 1, 1], [], []>} : vector<8x32xf32>, vector<32x128xf32>, vector<8x128xf32> -> vector<8x128xf32>
    %c0_11 = arith.constant 0 : index
    %c128 = arith.constant 128 : index
    %10 = vector.load %arg8[%c0_11, %c128] : memref<8x512xf32, #tpu.memory_space<vmem>>, vector<8x128xf32>
    tpu.vector_store %arg8[%c0_11, %c128], %9 {strides = array<i32>} : memref<8x512xf32, #tpu.memory_space<vmem>>, vector<8x128xf32>,
    %c0_12 = arith.constant 0 : index
    %c0_13 = arith.constant 0 : index
    %11 = vector.load %arg9[%c0_12, %c0_13] : memref<8x128xf32, #tpu.memory_space<vmem>>, vector<8x128xf32>
    %c1 = arith.constant 1 : index
    %12 = memref.load %arg7[%c1] : memref<16xf32, #tpu.memory_space<smem>>
    %13 = vector.broadcast %12 : f32 to vector<8x128xf32>
    %14 = arith.mulf %13, %9 : vector<8x128xf32>
    %15 = arith.addf %11, %14 : vector<8x128xf32>
    %c0_14 = arith.constant 0 : index
    %c0_15 = arith.constant 0 : index
    %16 = vector.load %arg9[%c0_14, %c0_15] : memref<8x128xf32, #tpu.memory_space<vmem>>, vector<8x128xf32>
    tpu.vector_store %arg9[%c0_14, %c0_15], %15 {strides = array<i32>} : memref<8x128xf32, #tpu.memory_space<vmem>>, vector<8x128xf32>,
    %c0_16 = arith.constant 0 : index
    %c0_17 = arith.constant 0 : index
    %17 = vector.load %arg3[%c0_16, %c0_17] : memref<8x32xf32, #tpu.memory_space<vmem>>, vector<8x32xf32>
    %cst_18 = arith.constant dense<0.000000e+00> : vector<8x128xf32>
    %18 = tpu.matmul %17, %0, %cst_18 {dimension_numbers = #tpu.dot_dimension_numbers<[1], [0], [0], [1], [0, 0, 1, 1], [], []>} : vector<8x32xf32>, vector<32x128xf32>, vector<8x128xf32> -> vector<8x128xf32>
    %c0_19 = arith.constant 0 : index
    %c256 = arith.constant 256 : index
    %19 = vector.load %arg8[%c0_19, %c256] : memref<8x512xf32, #tpu.memory_space<vmem>>, vector<8x128xf32>
    tpu.vector_store %arg8[%c0_19, %c256], %18 {strides = array<i32>} : memref<8x512xf32, #tpu.memory_space<vmem>>, vector<8x128xf32>,
    %c0_20 = arith.constant 0 : index
    %c0_21 = arith.constant 0 : index
    %20 = vector.load %arg9[%c0_20, %c0_21] : memref<8x128xf32, #tpu.memory_space<vmem>>, vector<8x128xf32>
    %c2 = arith.constant 2 : index
    %21 = memref.load %arg7[%c2] : memref<16xf32, #tpu.memory_space<smem>>
    %22 = vector.broadcast %21 : f32 to vector<8x128xf32>
    %23 = arith.mulf %22, %18 : vector<8x128xf32>
    %24 = arith.addf %20, %23 : vector<8x128xf32>
    %c0_22 = arith.constant 0 : index
    %c0_23 = arith.constant 0 : index
    %25 = vector.load %arg9[%c0_22, %c0_23] : memref<8x128xf32, #tpu.memory_space<vmem>>, vector<8x128xf32>
    tpu.vector_store %arg9[%c0_22, %c0_23], %24 {strides = array<i32>} : memref<8x128xf32, #tpu.memory_space<vmem>>, vector<8x128xf32>,
    %c0_24 = arith.constant 0 : index
    %c0_25 = arith.constant 0 : index
    %26 = vector.load %arg4[%c0_24, %c0_25] : memref<8x32xf32, #tpu.memory_space<vmem>>, vector<8x32xf32>
    %cst_26 = arith.constant dense<0.000000e+00> : vector<8x128xf32>
    %27 = tpu.matmul %26, %0, %cst_26 {dimension_numbers = #tpu.dot_dimension_numbers<[1], [0], [0], [1], [0, 0, 1, 1], [], []>} : vector<8x32xf32>, vector<32x128xf32>, vector<8x128xf32> -> vector<8x128xf32>
    %c0_27 = arith.constant 0 : index
    %c384 = arith.constant 384 : index
    %28 = vector.load %arg8[%c0_27, %c384] : memref<8x512xf32, #tpu.memory_space<vmem>>, vector<8x128xf32>
    tpu.vector_store %arg8[%c0_27, %c384], %27 {strides = array<i32>} : memref<8x512xf32, #tpu.memory_space<vmem>>, vector<8x128xf32>,
    %c0_28 = arith.constant 0 : index
    %c0_29 = arith.constant 0 : index
    %29 = vector.load %arg9[%c0_28, %c0_29] : memref<8x128xf32, #tpu.memory_space<vmem>>, vector<8x128xf32>
    %c3 = arith.constant 3 : index
    %30 = memref.load %arg7[%c3] : memref<16xf32, #tpu.memory_space<smem>>
    %31 = vector.broadcast %30 : f32 to vector<8x128xf32>
    %32 = arith.mulf %31, %27 : vector<8x128xf32>
    %33 = arith.addf %29, %32 : vector<8x128xf32>
    %c0_30 = arith.constant 0 : index
    %c0_31 = arith.constant 0 : index
    %34 = vector.load %arg9[%c0_30, %c0_31] : memref<8x128xf32, #tpu.memory_space<vmem>>, vector<8x128xf32>
    tpu.vector_store %arg9[%c0_30, %c0_31], %33 {strides = array<i32>} : memref<8x128xf32, #tpu.memory_space<vmem>>, vector<8x128xf32>,
    %c0_32 = arith.constant 0 : index
    %c0_33 = arith.constant 0 : index
    %35 = vector.load %arg6[%c0_32, %c0_33] : memref<1x128xf32, #tpu.memory_space<vmem>>, vector<1x128xf32>
    %c4 = arith.constant 4 : index
    %36 = memref.load %arg7[%c4] : memref<16xf32, #tpu.memory_space<smem>>
    %c8 = arith.constant 8 : index
    %37 = memref.load %arg7[%c8] : memref<16xf32, #tpu.memory_space<smem>>
    %c12 = arith.constant 12 : index
    %38 = memref.load %arg7[%c12] : memref<16xf32, #tpu.memory_space<smem>>
    %c0_34 = arith.constant 0 : index
    %c0_35 = arith.constant 0 : index
    %39 = vector.load %arg8[%c0_34, %c0_35] : memref<8x512xf32, #tpu.memory_space<vmem>>, vector<8x128xf32>
    %c0_36 = arith.constant 0 : index
    %c0_37 = arith.constant 0 : index
    %40 = vector.load %arg9[%c0_36, %c0_37] : memref<8x128xf32, #tpu.memory_space<vmem>>, vector<8x128xf32>
    %41 = vector.broadcast %36 : f32 to vector<8x128xf32>
    %42 = arith.mulf %41, %40 : vector<8x128xf32>
    %43 = vector.broadcast %37 : f32 to vector<8x128xf32>
    %44 = arith.mulf %43, %39 : vector<8x128xf32>
    %45 = arith.subf %42, %44 : vector<8x128xf32>
    %46 = vector.broadcast %38 : f32 to vector<1x128xf32>
    %47 = arith.mulf %46, %35 : vector<1x128xf32>
    %48 = vector.broadcast %47 : vector<1x128xf32> to vector<8x128xf32>
    %49 = arith.addf %45, %48 : vector<8x128xf32>
    %c0_38 = arith.constant 0 : index
    %c0_39 = arith.constant 0 : index
    %50 = vector.load %arg8[%c0_38, %c0_39] : memref<8x512xf32, #tpu.memory_space<vmem>>, vector<8x128xf32>
    tpu.vector_store %arg8[%c0_38, %c0_39], %49 {strides = array<i32>} : memref<8x512xf32, #tpu.memory_space<vmem>>, vector<8x128xf32>,
    %c5 = arith.constant 5 : index
    %51 = memref.load %arg7[%c5] : memref<16xf32, #tpu.memory_space<smem>>
    %c9 = arith.constant 9 : index
    %52 = memref.load %arg7[%c9] : memref<16xf32, #tpu.memory_space<smem>>
    %c13 = arith.constant 13 : index
    %53 = memref.load %arg7[%c13] : memref<16xf32, #tpu.memory_space<smem>>
    %c0_40 = arith.constant 0 : index
    %c128_41 = arith.constant 128 : index
    %54 = vector.load %arg8[%c0_40, %c128_41] : memref<8x512xf32, #tpu.memory_space<vmem>>, vector<8x128xf32>
    %c0_42 = arith.constant 0 : index
    %c0_43 = arith.constant 0 : index
    %55 = vector.load %arg9[%c0_42, %c0_43] : memref<8x128xf32, #tpu.memory_space<vmem>>, vector<8x128xf32>
    %56 = vector.broadcast %51 : f32 to vector<8x128xf32>
    %57 = arith.mulf %56, %55 : vector<8x128xf32>
    %58 = vector.broadcast %52 : f32 to vector<8x128xf32>
    %59 = arith.mulf %58, %54 : vector<8x128xf32>
    %60 = arith.subf %57, %59 : vector<8x128xf32>
    %61 = vector.broadcast %53 : f32 to vector<1x128xf32>
    %62 = arith.mulf %61, %35 : vector<1x128xf32>
    %63 = vector.broadcast %62 : vector<1x128xf32> to vector<8x128xf32>
    %64 = arith.addf %60, %63 : vector<8x128xf32>
    %c0_44 = arith.constant 0 : index
    %c128_45 = arith.constant 128 : index
    %65 = vector.load %arg8[%c0_44, %c128_45] : memref<8x512xf32, #tpu.memory_space<vmem>>, vector<8x128xf32>
    tpu.vector_store %arg8[%c0_44, %c128_45], %64 {strides = array<i32>} : memref<8x512xf32, #tpu.memory_space<vmem>>, vector<8x128xf32>,
    %c6 = arith.constant 6 : index
    %66 = memref.load %arg7[%c6] : memref<16xf32, #tpu.memory_space<smem>>
    %c10 = arith.constant 10 : index
    %67 = memref.load %arg7[%c10] : memref<16xf32, #tpu.memory_space<smem>>
    %c14 = arith.constant 14 : index
    %68 = memref.load %arg7[%c14] : memref<16xf32, #tpu.memory_space<smem>>
    %c0_46 = arith.constant 0 : index
    %c256_47 = arith.constant 256 : index
    %69 = vector.load %arg8[%c0_46, %c256_47] : memref<8x512xf32, #tpu.memory_space<vmem>>, vector<8x128xf32>
    %c0_48 = arith.constant 0 : index
    %c0_49 = arith.constant 0 : index
    %70 = vector.load %arg9[%c0_48, %c0_49] : memref<8x128xf32, #tpu.memory_space<vmem>>, vector<8x128xf32>
    %71 = vector.broadcast %66 : f32 to vector<8x128xf32>
    %72 = arith.mulf %71, %70 : vector<8x128xf32>
    %73 = vector.broadcast %67 : f32 to vector<8x128xf32>
    %74 = arith.mulf %73, %69 : vector<8x128xf32>
    %75 = arith.subf %72, %74 : vector<8x128xf32>
    %76 = vector.broadcast %68 : f32 to vector<1x128xf32>
    %77 = arith.mulf %76, %35 : vector<1x128xf32>
    %78 = vector.broadcast %77 : vector<1x128xf32> to vector<8x128xf32>
    %79 = arith.addf %75, %78 : vector<8x128xf32>
    %c0_50 = arith.constant 0 : index
    %c256_51 = arith.constant 256 : index
    %80 = vector.load %arg8[%c0_50, %c256_51] : memref<8x512xf32, #tpu.memory_space<vmem>>, vector<8x128xf32>
    tpu.vector_store %arg8[%c0_50, %c256_51], %79 {strides = array<i32>} : memref<8x512xf32, #tpu.memory_space<vmem>>, vector<8x128xf32>,
    %c7 = arith.constant 7 : index
    %81 = memref.load %arg7[%c7] : memref<16xf32, #tpu.memory_space<smem>>
    %c11 = arith.constant 11 : index
    %82 = memref.load %arg7[%c11] : memref<16xf32, #tpu.memory_space<smem>>
    %c15 = arith.constant 15 : index
    %83 = memref.load %arg7[%c15] : memref<16xf32, #tpu.memory_space<smem>>
    %c0_52 = arith.constant 0 : index
    %c384_53 = arith.constant 384 : index
    %84 = vector.load %arg8[%c0_52, %c384_53] : memref<8x512xf32, #tpu.memory_space<vmem>>, vector<8x128xf32>
    %c0_54 = arith.constant 0 : index
    %c0_55 = arith.constant 0 : index
    %85 = vector.load %arg9[%c0_54, %c0_55] : memref<8x128xf32, #tpu.memory_space<vmem>>, vector<8x128xf32>
    %86 = vector.broadcast %81 : f32 to vector<8x128xf32>
    %87 = arith.mulf %86, %85 : vector<8x128xf32>
    %88 = vector.broadcast %82 : f32 to vector<8x128xf32>
    %89 = arith.mulf %88, %84 : vector<8x128xf32>
    %90 = arith.subf %87, %89 : vector<8x128xf32>
    %91 = vector.broadcast %83 : f32 to vector<1x128xf32>
    %92 = arith.mulf %91, %35 : vector<1x128xf32>
    %93 = vector.broadcast %92 : vector<1x128xf32> to vector<8x128xf32>
    %94 = arith.addf %90, %93 : vector<8x128xf32>
    %c0_56 = arith.constant 0 : index
    %c384_57 = arith.constant 384 : index
    %95 = vector.load %arg8[%c0_56, %c384_57] : memref<8x512xf32, #tpu.memory_space<vmem>>, vector<8x128xf32>
    tpu.vector_store %arg8[%c0_56, %c384_57], %94 {strides = array<i32>} : memref<8x512xf32, #tpu.memory_space<vmem>>, vector<8x128xf32>,
    return
  }
  func.func @transform_0(%arg0: i32) -> (i32, i32) {
    %c0_i32 = arith.constant 0 : i32
    %c0_i32_0 = arith.constant 0 : i32
    return %arg0, %c0_i32 : i32, i32
  }
  func.func @transform_1(%arg0: i32) -> (i32, i32) {
    %c0_i32 = arith.constant 0 : i32
    %c0_i32_0 = arith.constant 0 : i32
    return %arg0, %c0_i32 : i32, i32
  }
  func.func @transform_2(%arg0: i32) -> (i32, i32) {
    %c0_i32 = arith.constant 0 : i32
    %c0_i32_0 = arith.constant 0 : i32
    return %arg0, %c0_i32 : i32, i32
  }
  func.func @transform_3(%arg0: i32) -> (i32, i32) {
    %c0_i32 = arith.constant 0 : i32
    %c0_i32_0 = arith.constant 0 : i32
    return %arg0, %c0_i32 : i32, i32
  }
  func.func @transform_4(%arg0: i32) -> (i32, i32) {
    %c0_i32 = arith.constant 0 : i32
    %c0_i32_0 = arith.constant 0 : i32
    %c0_i32_1 = arith.constant 0 : i32
    return %c0_i32, %c0_i32_0 : i32, i32
  }
  func.func @transform_5(%arg0: i32) -> (i32, i32) {
    %c0_i32 = arith.constant 0 : i32
    %c0_i32_0 = arith.constant 0 : i32
    %c0_i32_1 = arith.constant 0 : i32
    return %c0_i32, %c0_i32_0 : i32, i32
  }
  func.func @transform_6(%arg0: i32) -> i32 {
    %c0_i32 = arith.constant 0 : i32
    %c0_i32_0 = arith.constant 0 : i32
    return %c0_i32 : i32
  }
  func.func @transform_7(%arg0: i32) -> (i32, i32) {
    %c0_i32 = arith.constant 0 : i32
    %c0_i32_0 = arith.constant 0 : i32
    return %arg0, %c0_i32 : i32, i32
  }
}

</mosaic_0001>

<llo_original>
// kernel: tpu_custom_call.1
$region0: #{tpu_custom_call.1}
  #allocation0 [shape = 'u32[]', space=smem, size = 0x4, offset = 0x4, fixed_abs, tag = 'smem constant byte address 0x4 - core index']
  #allocation1 [shape = 'u32[144,128]{1,0:T(1,128)}', space=vmem, size = 0x12000, scoped, tag = 'internal scratch']
  #allocation2 [shape = 'f32[8,128]{1,0:T(8,128)}', space=vmem, size = 0x1000, scoped, tag = 'scratch operand']
  %s0 = inlined_call_operand.hbm [shape: f32[8,32], index: 0, kind: input, shape index: {}]
  %s1 = inlined_call_operand.hbm [shape: f32[8,32], index: 1, kind: input, shape index: {}]
  %s2 = inlined_call_operand.hbm [shape: f32[8,32], index: 2, kind: input, shape index: {}]
  %s3 = inlined_call_operand.hbm [shape: f32[8,32], index: 3, kind: input, shape index: {}]
  %s4 = inlined_call_operand.hbm [shape: f32[32,128], index: 4, kind: input, shape index: {}]
  %s5 = inlined_call_operand.vmem [shape: f32[1,128], index: 5, kind: input, shape index: {}]
  %s6 = inlined_call_operand.vmem [shape: f32[16], index: 6, kind: input, shape index: {}]
  %s7 = inlined_call_operand.hbm [shape: f32[8,512], index: 7, kind: output, shape index: {}]
  %s8 = sld [smem:[#allocation0]]
  $region62: #{tpu_custom_call.1} parent=0
    _
  %s10 = ssub.s32 1, %s8
  %s11 = scalar_select 0, %s10, %s8
  $region1: #{tpu_custom_call.1} parent=0
    #allocation3 [shape = 'u8[4096]{0}', space=vmem, size = 0x1000, scoped, tag = 'input window, operand 0, single buffered']
    #allocation4 [shape = 's32[1]{0}', space=sflag, size = 0x4, scoped, tag = 'scoped memory for tpu_custom_call.1']
    #allocation5 [shape = 's32[1]{0}', space=sflag, size = 0x4, scoped, tag = 'scoped memory for tpu_custom_call.1']
    #allocation6 [shape = 's32[1]{0}', space=sflag, size = 0x4, scoped, tag = 'scoped memory for tpu_custom_call.1']
    #allocation7 [shape = 'u8[4096]{0}', space=vmem, size = 0x1000, scoped, tag = 'input window, operand 1, single buffered']
    #allocation8 [shape = 's32[1]{0}', space=sflag, size = 0x4, scoped, tag = 'scoped memory for tpu_custom_call.1']
    #allocation9 [shape = 'u8[4096]{0}', space=vmem, size = 0x1000, scoped, tag = 'input window, operand 2, single buffered']
    #allocation10 [shape = 'u8[4096]{0}', space=vmem, size = 0x1000, scoped, tag = 'input window, operand 3, single buffered']
    #allocation11 [shape = 's32[1]{0}', space=sflag, size = 0x4, scoped, tag = 'scoped memory for tpu_custom_call.1']
    #allocation12 [shape = 'u8[16384]{0}', space=vmem, size = 0x4000, scoped, tag = 'input window, operand 4, single buffered']
    #allocation13 [shape = 'u8[512]{0}', space=smem, size = 0x200, scoped, tag = 'input window, operand 6, single buffered']
    #allocation14 [shape = 'u8[16384]{0}', space=vmem, size = 0x4000, scoped, tag = 'output window, operand 0, single buffered']
    %12 = vsyncpa [#allocation4], 0
    %13 = vsyncpa [#allocation8], 0
    %14 = vsyncpa [#allocation11], 0
    %15 = vsyncpa [#allocation6], 0
    %16 = vsyncpa [#allocation5], 0
    // Predicated region
    $region2: #{tpu_custom_call.1} parent=1 // pred_check
      _
    $region3: #{tpu_custom_call.1} parent=1 // pred_check_branch
      %18 = sbr.rel (0) target = $region5
    $region4: #{tpu_custom_call.1} parent=1 // pred_region
      %s20 = ssub.s32 128, 128
      %21 = vsyncadd [#allocation4], %s20
      %s23 = sshll.u32 [#allocation3], 4
      %s24 = int_to_ptr.vmem [resolvable:$true] %s23
      %26 = dma.hbm_to_vmem [thread:$0]  %s0, 128, %s24, [#allocation4]
    $region5: #{tpu_custom_call.1} parent=1 // pred_fallthru
      _
    // Predicated region
    $region6: #{tpu_custom_call.1} parent=1 // pred_check
      _
    $region7: #{tpu_custom_call.1} parent=1 // pred_check_branch
      %28 = sbr.rel (0) target = $region9
    $region8: #{tpu_custom_call.1} parent=1 // pred_region
      %s30 = ssub.s32 128, 128
      %31 = vsyncadd [#allocation8], %s30
      %s33 = sshll.u32 [#allocation7], 4
      %s34 = int_to_ptr.vmem [resolvable:$true] %s33
      %36 = dma.hbm_to_vmem [thread:$0]  %s1, 128, %s34, [#allocation8]
    $region9: #{tpu_custom_call.1} parent=1 // pred_fallthru
      _
    // Predicated region
    $region10: #{tpu_custom_call.1} parent=1 // pred_check
      _
    $region11: #{tpu_custom_call.1} parent=1 // pred_check_branch
      %38 = sbr.rel (0) target = $region13
    $region12: #{tpu_custom_call.1} parent=1 // pred_region
      %s40 = ssub.s32 128, 128
      %41 = vsyncadd [#allocation8], %s40
      %s43 = sshll.u32 [#allocation9], 4
      %s44 = int_to_ptr.vmem [resolvable:$true] %s43
      %46 = dma.hbm_to_vmem [thread:$0]  %s2, 128, %s44, [#allocation8]
    $region13: #{tpu_custom_call.1} parent=1 // pred_fallthru
      _
    // Predicated region
    $region14: #{tpu_custom_call.1} parent=1 // pred_check
      _
    $region15: #{tpu_custom_call.1} parent=1 // pred_check_branch
      %48 = sbr.rel (0) target = $region17
    $region16: #{tpu_custom_call.1} parent=1 // pred_region
      %s50 = ssub.s32 128, 128
      %51 = vsyncadd [#allocation11], %s50
      %s53 = sshll.u32 [#allocation10], 4
      %s54 = int_to_ptr.vmem [resolvable:$true] %s53
      %56 = dma.hbm_to_vmem [thread:$0]  %s3, 128, %s54, [#allocation11]
    $region17: #{tpu_custom_call.1} parent=1 // pred_fallthru
      _
    // Predicated region
    $region18: #{tpu_custom_call.1} parent=1 // pred_check
      _
    $region19: #{tpu_custom_call.1} parent=1 // pred_check_branch
      %58 = sbr.rel (0) target = $region21
    $region20: #{tpu_custom_call.1} parent=1 // pred_region
      %s60 = ssub.s32 512, 512
      %61 = vsyncadd [#allocation11], %s60
      %s62 = sshll.u32 [#allocation12], 4
      %s63 = int_to_ptr.vmem [resolvable:$true] %s62
      %68 = dma.hbm_to_vmem [thread:$0]  %s4, 512, %s63, [#allocation11], 128, 128, 8
    $region21: #{tpu_custom_call.1} parent=1 // pred_fallthru
      _
    // Predicated region
    $region22: #{tpu_custom_call.1} parent=1 // pred_check
      _
    $region23: #{tpu_custom_call.1} parent=1 // pred_check_branch
      %70 = sbr.rel (0) target = $region25
    $region24: #{tpu_custom_call.1} parent=1 // pred_region
      _
    $region25: #{tpu_custom_call.1} parent=1 // pred_fallthru
      _
    // Predicated region
    $region26: #{tpu_custom_call.1} parent=1 // pred_check
      _
    $region27: #{tpu_custom_call.1} parent=1 // pred_check_branch
      %72 = sbr.rel (0) target = $region29
    $region28: #{tpu_custom_call.1} parent=1 // pred_region
      %s74 = ssub.s32 16, 16
      %75 = vsyncadd [#allocation6], %s74
      %s77 = sshll.u32 %s6, 4
      %s78 = int_to_ptr.vmem [resolvable:$true] %s77
      %80 = dma.vmem_to_smem %s78, 16, [#allocation13], [#allocation6]
    $region29: #{tpu_custom_call.1} parent=1 // pred_fallthru
      _
    // Predicated region
    $region30: #{tpu_custom_call.1} parent=1 // pred_check
      _
    $region31: #{tpu_custom_call.1} parent=1 // pred_check_branch
      %82 = sbr.rel (0) target = $region33
    $region32: #{tpu_custom_call.1} parent=1 // pred_region
      %83 = dma.done [#allocation4], 128
    $region33: #{tpu_custom_call.1} parent=1 // pred_fallthru
      _
    // Predicated region
    $region34: #{tpu_custom_call.1} parent=1 // pred_check
      _
    $region35: #{tpu_custom_call.1} parent=1 // pred_check_branch
      %85 = sbr.rel (0) target = $region37
    $region36: #{tpu_custom_call.1} parent=1 // pred_region
      %86 = dma.done [#allocation8], 128
    $region37: #{tpu_custom_call.1} parent=1 // pred_fallthru
      _
    // Predicated region
    $region38: #{tpu_custom_call.1} parent=1 // pred_check
      _
    $region39: #{tpu_custom_call.1} parent=1 // pred_check_branch
      %88 = sbr.rel (0) target = $region41
    $region40: #{tpu_custom_call.1} parent=1 // pred_region
      %89 = dma.done [#allocation8], 128
    $region41: #{tpu_custom_call.1} parent=1 // pred_fallthru
      _
    // Predicated region
    $region42: #{tpu_custom_call.1} parent=1 // pred_check
      _
    $region43: #{tpu_custom_call.1} parent=1 // pred_check_branch
      %91 = sbr.rel (0) target = $region45
    $region44: #{tpu_custom_call.1} parent=1 // pred_region
      %92 = dma.done [#allocation11], 128
    $region45: #{tpu_custom_call.1} parent=1 // pred_fallthru
      _
    // Predicated region
    $region46: #{tpu_custom_call.1} parent=1 // pred_check
      _
    $region47: #{tpu_custom_call.1} parent=1 // pred_check_branch
      %94 = sbr.rel (0) target = $region49
    $region48: #{tpu_custom_call.1} parent=1 // pred_region
      %95 = dma.done [#allocation11], 512
    $region49: #{tpu_custom_call.1} parent=1 // pred_fallthru
      _
    // Predicated region
    $region50: #{tpu_custom_call.1} parent=1 // pred_check
      _
    $region51: #{tpu_custom_call.1} parent=1 // pred_check_branch
      %97 = sbr.rel (0) target = $region53
    $region52: #{tpu_custom_call.1} parent=1 // pred_region
      %98 = dma.done [#allocation6], 16
    $region53: #{tpu_custom_call.1} parent=1 // pred_fallthru
      _
    %99 = sfence
    %v100 = vld [vmem:[#allocation12] sm:$0xff]
    %v101 = vld [vmem:[#allocation12 + $0x8] sm:$0xff]
    %v102 = vld [vmem:[#allocation12 + $0x10] sm:$0xff]
    %v103 = vld [vmem:[#allocation12 + $0x18] sm:$0xff]
    %v104 = vld [vmem:[#allocation3] sm:$0xff]
    %vm105 = vcmask 261120
    %v107 = vsel %vm105, %v104, 0
    %109 = vmatprep.subr.mxu0 0.0
    %110 = vmatpush1.msra.mxu0 0.0
    %111 = vmatprep.subr.mxu0 0.0
    %112 = vmatpush1.msra.mxu0 0.0
    %113 = vmatprep.subr.mxu0 0.0
    %114 = vmatpush1.msra.mxu0 0.0
    %115 = vmatprep.subr.mxu0 0.0
    %116 = vmatpush1.msra.mxu0 0.0
    %117 = vmatprep.subr.mxu0 0.0
    %118 = vmatpush1.msra.mxu0 0.0
    %119 = vmatprep.subr.mxu0 0.0
    %120 = vmatpush1.msra.mxu0 0.0
    %121 = vmatprep.subr.mxu0 0.0
    %122 = vmatpush1.msra.mxu0 0.0
    %123 = vmatprep.subr.mxu0 0.0
    %124 = vmatpush1.msra.mxu0 0.0
    %125 = vmatprep.subr.mxu0 0.0
    %126 = vmatpush1.msra.mxu0 0.0
    %127 = vmatprep.subr.mxu0 0.0
    %128 = vmatpush1.msra.mxu0 0.0
    %129 = vmatprep.subr.mxu0 0.0
    %130 = vmatpush1.msra.mxu0 0.0
    %131 = vmatprep.subr.mxu0 0.0
    %132 = vmatpush1.msra.mxu0 0.0
    %133 = vmatprep.subr.mxu0 0.0
    %134 = vmatpush1.msra.mxu0 %v103
    %135 = vmatprep.subr.mxu0 0.0
    %136 = vmatpush1.msra.mxu0 %v102
    %137 = vmatprep.subr.mxu0 0.0
    %138 = vmatpush1.msra.mxu0 %v101
    %139 = vmatprep.subr.mxu0 0.0
    %140 = vmatpush1.msra.mxu0 %v100
    %141 = vmatprep.subr.mxu0 0.0
    %142 = vmatpush2.msra.mxu0 0.0
    %143 = vmatprep.subr.mxu0 0.0
    %144 = vmatpush2.msra.mxu0 0.0
    %145 = vmatprep.subr.mxu0 0.0
    %146 = vmatpush2.msra.mxu0 0.0
    %147 = vmatprep.subr.mxu0 0.0
    %148 = vmatpush2.msra.mxu0 0.0
    %149 = vmatprep.subr.mxu0 0.0
    %150 = vmatpush2.msra.mxu0 0.0
    %151 = vmatprep.subr.mxu0 0.0
    %152 = vmatpush2.msra.mxu0 0.0
    %153 = vmatprep.subr.mxu0 0.0
    %154 = vmatpush2.msra.mxu0 0.0
    %155 = vmatprep.subr.mxu0 0.0
    %156 = vmatpush2.msra.mxu0 0.0
    %157 = vmatprep.subr.mxu0 0.0
    %158 = vmatpush2.msra.mxu0 0.0
    %159 = vmatprep.subr.mxu0 0.0
    %160 = vmatpush2.msra.mxu0 0.0
    %161 = vmatprep.subr.mxu0 0.0
    %162 = vmatpush2.msra.mxu0 0.0
    %163 = vmatprep.subr.mxu0 0.0
    %164 = vmatpush2.msra.mxu0 0.0
    %165 = vmatprep.subr.mxu0 0.0
    %166 = vmatpush2.msra.mxu0 0.0
    %167 = vmatprep.subr.mxu0 0.0
    %168 = vmatpush2.msra.mxu0 0.0
    %169 = vmatprep.subr.mxu0 0.0
    %170 = vmatpush2.msra.mxu0 0.0
    %171 = vmatprep.subr.mxu0 0.0
    %172 = vmatpush2.msra.mxu0 0.0
    %173 = vmatprep.mubr.f32.mxu0 0.0
    %174 = vmatmul.mubr.f32.gmra.mxu0 %v107
    %v175 = vpop.f32.mrf.mxu0
    %v176 = vadd.f32 0.0, %v175
    %v177 = vpop.f32.mrf.mxu0
    %178 = vdwg.mxu0
    %179 = vst [vmem:[#allocation14] sm:$0xff] %v176
    %s180 = sld [smem:[#allocation13]]
    %v181 = vstv %s180
    %v182 = vmul.f32 %v181, %v176
    %183 = vst [vmem:[#allocation2] sm:$0xff] %v182
    %v184 = vld [vmem:[#allocation7] sm:$0xff]
    %v186 = vsel %vm105, %v184, 0
    %188 = vmatprep.subr.mxu0 0.0
    %189 = vmatpush1.msra.mxu0 0.0
    %190 = vmatprep.subr.mxu0 0.0
    %191 = vmatpush1.msra.mxu0 0.0
    %192 = vmatprep.subr.mxu0 0.0
    %193 = vmatpush1.msra.mxu0 0.0
    %194 = vmatprep.subr.mxu0 0.0
    %195 = vmatpush1.msra.mxu0 0.0
    %196 = vmatprep.subr.mxu0 0.0
    %197 = vmatpush1.msra.mxu0 0.0
    %198 = vmatprep.subr.mxu0 0.0
    %199 = vmatpush1.msra.mxu0 0.0
    %200 = vmatprep.subr.mxu0 0.0
    %201 = vmatpush1.msra.mxu0 0.0
    %202 = vmatprep.subr.mxu0 0.0
    %203 = vmatpush1.msra.mxu0 0.0
    %204 = vmatprep.subr.mxu0 0.0
    %205 = vmatpush1.msra.mxu0 0.0
    %206 = vmatprep.subr.mxu0 0.0
    %207 = vmatpush1.msra.mxu0 0.0
    %208 = vmatprep.subr.mxu0 0.0
    %209 = vmatpush1.msra.mxu0 0.0
    %210 = vmatprep.subr.mxu0 0.0
    %211 = vmatpush1.msra.mxu0 0.0
    %212 = vmatprep.subr.mxu0 0.0
    %213 = vmatpush1.msra.mxu0 %v103
    %214 = vmatprep.subr.mxu0 0.0
    %215 = vmatpush1.msra.mxu0 %v102
    %216 = vmatprep.subr.mxu0 0.0
    %217 = vmatpush1.msra.mxu0 %v101
    %218 = vmatprep.subr.mxu0 0.0
    %219 = vmatpush1.msra.mxu0 %v100
    %220 = vmatprep.subr.mxu0 0.0
    %221 = vmatpush2.msra.mxu0 0.0
    %222 = vmatprep.subr.mxu0 0.0
    %223 = vmatpush2.msra.mxu0 0.0
    %224 = vmatprep.subr.mxu0 0.0
    %225 = vmatpush2.msra.mxu0 0.0
    %226 = vmatprep.subr.mxu0 0.0
    %227 = vmatpush2.msra.mxu0 0.0
    %228 = vmatprep.subr.mxu0 0.0
    %229 = vmatpush2.msra.mxu0 0.0
    %230 = vmatprep.subr.mxu0 0.0
    %231 = vmatpush2.msra.mxu0 0.0
    %232 = vmatprep.subr.mxu0 0.0
    %233 = vmatpush2.msra.mxu0 0.0
    %234 = vmatprep.subr.mxu0 0.0
    %235 = vmatpush2.msra.mxu0 0.0
    %236 = vmatprep.subr.mxu0 0.0
    %237 = vmatpush2.msra.mxu0 0.0
    %238 = vmatprep.subr.mxu0 0.0
    %239 = vmatpush2.msra.mxu0 0.0
    %240 = vmatprep.subr.mxu0 0.0
    %241 = vmatpush2.msra.mxu0 0.0
    %242 = vmatprep.subr.mxu0 0.0
    %243 = vmatpush2.msra.mxu0 0.0
    %244 = vmatprep.subr.mxu0 0.0
    %245 = vmatpush2.msra.mxu0 0.0
    %246 = vmatprep.subr.mxu0 0.0
    %247 = vmatpush2.msra.mxu0 0.0
    %248 = vmatprep.subr.mxu0 0.0
    %249 = vmatpush2.msra.mxu0 0.0
    %250 = vmatprep.subr.mxu0 0.0
    %251 = vmatpush2.msra.mxu0 0.0
    %252 = vmatprep.mubr.f32.mxu0 0.0
    %253 = vmatmul.mubr.f32.gmra.mxu0 %v186
    %v254 = vpop.f32.mrf.mxu0
    %v255 = vadd.f32 0.0, %v254
    %v256 = vpop.f32.mrf.mxu0
    %257 = vdwg.mxu0
    %258 = vst [vmem:[#allocation14 + $0x8] sm:$0xff] %v255
    %v259 = vld [vmem:[#allocation2] sm:$0xff]
    %s260 = sld [smem:[#allocation13 + $0x1]]
    %v261 = vstv %s260
    %v262 = vmul.f32 %v261, %v255
    %v263 = vadd.f32 %v259, %v262
    %264 = vst [vmem:[#allocation2] sm:$0xff] %v263
    %v265 = vld [vmem:[#allocation9] sm:$0xff]
    %v267 = vsel %vm105, %v265, 0
    %269 = vmatprep.subr.mxu0 0.0
    %270 = vmatpush1.msra.mxu0 0.0
    %271 = vmatprep.subr.mxu0 0.0
    %272 = vmatpush1.msra.mxu0 0.0
    %273 = vmatprep.subr.mxu0 0.0
    %274 = vmatpush1.msra.mxu0 0.0
    %275 = vmatprep.subr.mxu0 0.0
    %276 = vmatpush1.msra.mxu0 0.0
    %277 = vmatprep.subr.mxu0 0.0
    %278 = vmatpush1.msra.mxu0 0.0
    %279 = vmatprep.subr.mxu0 0.0
    %280 = vmatpush1.msra.mxu0 0.0
    %281 = vmatprep.subr.mxu0 0.0
    %282 = vmatpush1.msra.mxu0 0.0
    %283 = vmatprep.subr.mxu0 0.0
    %284 = vmatpush1.msra.mxu0 0.0
    %285 = vmatprep.subr.mxu0 0.0
    %286 = vmatpush1.msra.mxu0 0.0
    %287 = vmatprep.subr.mxu0 0.0
    %288 = vmatpush1.msra.mxu0 0.0
    %289 = vmatprep.subr.mxu0 0.0
    %290 = vmatpush1.msra.mxu0 0.0
    %291 = vmatprep.subr.mxu0 0.0
    %292 = vmatpush1.msra.mxu0 0.0
    %293 = vmatprep.subr.mxu0 0.0
    %294 = vmatpush1.msra.mxu0 %v103
    %295 = vmatprep.subr.mxu0 0.0
    %296 = vmatpush1.msra.mxu0 %v102
    %297 = vmatprep.subr.mxu0 0.0
    %298 = vmatpush1.msra.mxu0 %v101
    %299 = vmatprep.subr.mxu0 0.0
    %300 = vmatpush1.msra.mxu0 %v100
    %301 = vmatprep.subr.mxu0 0.0
    %302 = vmatpush2.msra.mxu0 0.0
    %303 = vmatprep.subr.mxu0 0.0
    %304 = vmatpush2.msra.mxu0 0.0
    %305 = vmatprep.subr.mxu0 0.0
    %306 = vmatpush2.msra.mxu0 0.0
    %307 = vmatprep.subr.mxu0 0.0
    %308 = vmatpush2.msra.mxu0 0.0
    %309 = vmatprep.subr.mxu0 0.0
    %310 = vmatpush2.msra.mxu0 0.0
    %311 = vmatprep.subr.mxu0 0.0
    %312 = vmatpush2.msra.mxu0 0.0
    %313 = vmatprep.subr.mxu0 0.0
    %314 = vmatpush2.msra.mxu0 0.0
    %315 = vmatprep.subr.mxu0 0.0
    %316 = vmatpush2.msra.mxu0 0.0
    %317 = vmatprep.subr.mxu0 0.0
    %318 = vmatpush2.msra.mxu0 0.0
    %319 = vmatprep.subr.mxu0 0.0
    %320 = vmatpush2.msra.mxu0 0.0
    %321 = vmatprep.subr.mxu0 0.0
    %322 = vmatpush2.msra.mxu0 0.0
    %323 = vmatprep.subr.mxu0 0.0
    %324 = vmatpush2.msra.mxu0 0.0
    %325 = vmatprep.subr.mxu0 0.0
    %326 = vmatpush2.msra.mxu0 0.0
    %327 = vmatprep.subr.mxu0 0.0
    %328 = vmatpush2.msra.mxu0 0.0
    %329 = vmatprep.subr.mxu0 0.0
    %330 = vmatpush2.msra.mxu0 0.0
    %331 = vmatprep.subr.mxu0 0.0
    %332 = vmatpush2.msra.mxu0 0.0
    %333 = vmatprep.mubr.f32.mxu0 0.0
    %334 = vmatmul.mubr.f32.gmra.mxu0 %v267
    %v335 = vpop.f32.mrf.mxu0
    %v336 = vadd.f32 0.0, %v335
    %v337 = vpop.f32.mrf.mxu0
    %338 = vdwg.mxu0
    %339 = vst [vmem:[#allocation14 + $0x10] sm:$0xff] %v336
    %v340 = vld [vmem:[#allocation2] sm:$0xff]
    %s341 = sld [smem:[#allocation13 + $0x2]]
    %v342 = vstv %s341
    %v343 = vmul.f32 %v342, %v336
    %v344 = vadd.f32 %v340, %v343
    %345 = vst [vmem:[#allocation2] sm:$0xff] %v344
    %v346 = vld [vmem:[#allocation10] sm:$0xff]
    %v348 = vsel %vm105, %v346, 0
    %350 = vmatprep.subr.mxu0 0.0
    %351 = vmatpush1.msra.mxu0 0.0
    %352 = vmatprep.subr.mxu0 0.0
    %353 = vmatpush1.msra.mxu0 0.0
    %354 = vmatprep.subr.mxu0 0.0
    %355 = vmatpush1.msra.mxu0 0.0
    %356 = vmatprep.subr.mxu0 0.0
    %357 = vmatpush1.msra.mxu0 0.0
    %358 = vmatprep.subr.mxu0 0.0
    %359 = vmatpush1.msra.mxu0 0.0
    %360 = vmatprep.subr.mxu0 0.0
    %361 = vmatpush1.msra.mxu0 0.0
    %362 = vmatprep.subr.mxu0 0.0
    %363 = vmatpush1.msra.mxu0 0.0
    %364 = vmatprep.subr.mxu0 0.0
    %365 = vmatpush1.msra.mxu0 0.0
    %366 = vmatprep.subr.mxu0 0.0
    %367 = vmatpush1.msra.mxu0 0.0
    %368 = vmatprep.subr.mxu0 0.0
    %369 = vmatpush1.msra.mxu0 0.0
    %370 = vmatprep.subr.mxu0 0.0
    %371 = vmatpush1.msra.mxu0 0.0
    %372 = vmatprep.subr.mxu0 0.0
    %373 = vmatpush1.msra.mxu0 0.0
    %374 = vmatprep.subr.mxu0 0.0
    %375 = vmatpush1.msra.mxu0 %v103
    %376 = vmatprep.subr.mxu0 0.0
    %377 = vmatpush1.msra.mxu0 %v102
    %378 = vmatprep.subr.mxu0 0.0
    %379 = vmatpush1.msra.mxu0 %v101
    %380 = vmatprep.subr.mxu0 0.0
    %381 = vmatpush1.msra.mxu0 %v100
    %382 = vmatprep.subr.mxu0 0.0
    %383 = vmatpush2.msra.mxu0 0.0
    %384 = vmatprep.subr.mxu0 0.0
    %385 = vmatpush2.msra.mxu0 0.0
    %386 = vmatprep.subr.mxu0 0.0
    %387 = vmatpush2.msra.mxu0 0.0
    %388 = vmatprep.subr.mxu0 0.0
    %389 = vmatpush2.msra.mxu0 0.0
    %390 = vmatprep.subr.mxu0 0.0
    %391 = vmatpush2.msra.mxu0 0.0
    %392 = vmatprep.subr.mxu0 0.0
    %393 = vmatpush2.msra.mxu0 0.0
    %394 = vmatprep.subr.mxu0 0.0
    %395 = vmatpush2.msra.mxu0 0.0
    %396 = vmatprep.subr.mxu0 0.0
    %397 = vmatpush2.msra.mxu0 0.0
    %398 = vmatprep.subr.mxu0 0.0
    %399 = vmatpush2.msra.mxu0 0.0
    %400 = vmatprep.subr.mxu0 0.0
    %401 = vmatpush2.msra.mxu0 0.0
    %402 = vmatprep.subr.mxu0 0.0
    %403 = vmatpush2.msra.mxu0 0.0
    %404 = vmatprep.subr.mxu0 0.0
    %405 = vmatpush2.msra.mxu0 0.0
    %406 = vmatprep.subr.mxu0 0.0
    %407 = vmatpush2.msra.mxu0 0.0
    %408 = vmatprep.subr.mxu0 0.0
    %409 = vmatpush2.msra.mxu0 0.0
    %410 = vmatprep.subr.mxu0 0.0
    %411 = vmatpush2.msra.mxu0 0.0
    %412 = vmatprep.subr.mxu0 0.0
    %413 = vmatpush2.msra.mxu0 0.0
    %414 = vmatprep.mubr.f32.mxu0 0.0
    %415 = vmatmul.mubr.f32.gmra.mxu0 %v348
    %v416 = vpop.f32.mrf.mxu0
    %v417 = vadd.f32 0.0, %v416
    %v418 = vpop.f32.mrf.mxu0
    %419 = vdwg.mxu0
    %420 = vst [vmem:[#allocation14 + $0x18] sm:$0xff] %v417
    %v421 = vld [vmem:[#allocation2] sm:$0xff]
    %s422 = sld [smem:[#allocation13 + $0x3]]
    %v423 = vstv %s422
    %v424 = vmul.f32 %v423, %v417
    %v425 = vadd.f32 %v421, %v424
    %426 = vst [vmem:[#allocation2] sm:$0xff] %v425
    %v427 = vld [vmem:[%s5] sm:$0x1]
    %s428 = sld [smem:[#allocation13 + $0x4]]
    %s429 = sld [smem:[#allocation13 + $0x8]]
    %s430 = sld [smem:[#allocation13 + $0xc]]
    %v431 = vld [vmem:[#allocation14] sm:$0xff]
    %v432 = vld [vmem:[#allocation2] sm:$0xff]
    %v433 = vstv %s428
    %v434 = vmul.f32 %v433, %v432
    %v435 = vstv %s429
    %v436 = vmul.f32 %v435, %v431
    %v437 = vsub.f32 %v434, %v436
    %v438 = vstv %s430
    %v439 = vmul.f32 %v438, %v427
    %v441 = vlaneseq
    %v442 = vshrl.u32 %v441, 7
    %v443 = vsub.s32 0, %v442
    %v444 = vrot.slane %v439, %v443
    %v446 = vadd.f32 %v437, %v444
    %447 = vst [vmem:[#allocation14] sm:$0xff] %v446
    %s448 = sld [smem:[#allocation13 + $0x5]]
    %s449 = sld [smem:[#allocation13 + $0x9]]
    %s450 = sld [smem:[#allocation13 + $0xd]]
    %v451 = vld [vmem:[#allocation14 + $0x8] sm:$0xff]
    %v452 = vld [vmem:[#allocation2] sm:$0xff]
    %v453 = vstv %s448
    %v454 = vmul.f32 %v453, %v452
    %v455 = vstv %s449
    %v456 = vmul.f32 %v455, %v451
    %v457 = vsub.f32 %v454, %v456
    %v458 = vstv %s450
    %v459 = vmul.f32 %v458, %v427
    %v461 = vlaneseq
    %v462 = vshrl.u32 %v461, 7
    %v463 = vsub.s32 0, %v462
    %v464 = vrot.slane %v459, %v463
    %v466 = vadd.f32 %v457, %v464
    %467 = vst [vmem:[#allocation14 + $0x8] sm:$0xff] %v466
    %s468 = sld [smem:[#allocation13 + $0x6]]
    %s469 = sld [smem:[#allocation13 + $0xa]]
    %s470 = sld [smem:[#allocation13 + $0xe]]
    %v471 = vld [vmem:[#allocation14 + $0x10] sm:$0xff]
    %v472 = vld [vmem:[#allocation2] sm:$0xff]
    %v473 = vstv %s468
    %v474 = vmul.f32 %v473, %v472
    %v475 = vstv %s469
    %v476 = vmul.f32 %v475, %v471
    %v477 = vsub.f32 %v474, %v476
    %v478 = vstv %s470
    %v479 = vmul.f32 %v478, %v427
    %v481 = vlaneseq
    %v482 = vshrl.u32 %v481, 7
    %v483 = vsub.s32 0, %v482
    %v484 = vrot.slane %v479, %v483
    %v486 = vadd.f32 %v477, %v484
    %487 = vst [vmem:[#allocation14 + $0x10] sm:$0xff] %v486
    %s488 = sld [smem:[#allocation13 + $0x7]]
    %s489 = sld [smem:[#allocation13 + $0xb]]
    %s490 = sld [smem:[#allocation13 + $0xf]]
    %v491 = vld [vmem:[#allocation14 + $0x18] sm:$0xff]
    %v492 = vld [vmem:[#allocation2] sm:$0xff]
    %v493 = vstv %s488
    %v494 = vmul.f32 %v493, %v492
    %v495 = vstv %s489
    %v496 = vmul.f32 %v495, %v491
    %v497 = vsub.f32 %v494, %v496
    %v498 = vstv %s490
    %v499 = vmul.f32 %v498, %v427
    %v501 = vlaneseq
    %v502 = vshrl.u32 %v501, 7
    %v503 = vsub.s32 0, %v502
    %v504 = vrot.slane %v499, %v503
    %v506 = vadd.f32 %v497, %v504
    %507 = vst [vmem:[#allocation14 + $0x18] sm:$0xff] %v506
    // Predicated region
    $region54: #{tpu_custom_call.1} parent=1 // pred_check
      _
    $region55: #{tpu_custom_call.1} parent=1 // pred_check_branch
      %509 = sbr.rel (0) target = $region57
    $region56: #{tpu_custom_call.1} parent=1 // pred_region
      %s511 = ssub.s32 512, 512
      %512 = vsyncadd [#allocation5], %s511
      %s514 = sshll.u32 [#allocation14], 4
      %s515 = int_to_ptr.vmem [resolvable:$true] %s514
      %517 = dma.vmem_to_hbm [thread:$0]  %s515, 512, %s7, [#allocation5]
    $region57: #{tpu_custom_call.1} parent=1 // pred_fallthru
      _
    // Predicated region
    $region58: #{tpu_custom_call.1} parent=1 // pred_check
      _
    $region59: #{tpu_custom_call.1} parent=1 // pred_check_branch
      %519 = sbr.rel (0) target = $region61
    $region60: #{tpu_custom_call.1} parent=1 // pred_region
      %520 = dma.done [#allocation5], 512
    $region61: #{tpu_custom_call.1} parent=1 // pred_fallthru
      _
    %521 = vsyncpa [#allocation4], 1
    %522 = vsyncpa [#allocation8], 1
    %523 = vsyncpa [#allocation11], 1
    %524 = vsyncpa [#allocation5], 1
    %525 = vsyncpa [#allocation6], 1

</llo_original>
